<compile_context>
chip_gen: v7x
topology: tpu7x:2x2x1
jax: 0.10.0
libtpu: 0.0.40
codegen_flags: <defaults>
</compile_context>

<pallas_src>
import jax
import jax.numpy as jnp
from jax.experimental import pallas as pl
from jax.experimental.pallas import tpu as pltpu


PACK = 8  # samples packed per row of the lane-dense view (f32 sublane count)


def wide_deep_kernel(x_ref,            # (TR, PACK*D)       packed samples, lane-dense
                     a1_ref, b1_ref,   # (PACK*D,  PACK*H0), (1, PACK*H0)   deep layer 1
                     a2_ref, b2_ref,   # (PACK*H0, PACK*H1), (1, PACK*H1)   deep layer 2
                     aw_ref,           # (PACK*D,  PACK)  wide head * wf[0] (final lin. folded)
                     ad_ref,           # (PACK*H1, PACK)  deep head * wf[1] (final lin. folded)
                     bias_ref,         # SMEM (1, 1)      bw*wf[0] + bd*wf[1] + bf
                     o_ref):           # (TR, PACK)       sigmoid output, same packing as x
    x = x_ref[...].astype(a1_ref.dtype)            # no-op cast on the f32 path

    # Deep MLP on the packed layout: the block-diagonal kron(I_8, W^T) weights keep the
    # 8 packed samples independent, so one lane-dense MXU matmul == 8 per-sample dots.
    h = jnp.dot(x, a1_ref[...], preferred_element_type=jnp.float32) + b1_ref[...]
    h = jnp.maximum(h, 0.0).astype(a2_ref.dtype)   # ReLU (Dropout == identity in eval)
    h = jnp.dot(h, a2_ref[...], preferred_element_type=jnp.float32) + b2_ref[...]
    h = jnp.maximum(h, 0.0).astype(ad_ref.dtype)   # (TR, PACK*H1)

    # Wide & deep heads (out_features == 1 each); final Linear(2->1) already folded in.
    wide = jnp.dot(x, aw_ref[...], preferred_element_type=jnp.float32)   # (TR, PACK)
    deep = jnp.dot(h, ad_ref[...], preferred_element_type=jnp.float32)   # (TR, PACK)

    logit = wide + deep + bias_ref[0, 0]
    o_ref[...] = jax.nn.sigmoid(logit).astype(o_ref.dtype)


def prepare_kernel_params(params, compute_dtype=jnp.float32):
    """Fold final Linear(2->1) into the heads, zero-pad deep layer 1 (emulates x[:, 1:]),
    and expand every weight to its block-diagonal packed form kron(I_PACK, W^T)."""
    ww, bw, w1, b1, w2, b2, wd, bd, wf, bf = params
    wf0, wf1 = wf[0, 0], wf[0, 1]
    eye = jnp.eye(PACK, dtype=jnp.float32)

    w1k = jnp.pad(w1, ((0, 0), (1, 0)))                       # (H0, D): zero col for feature 0
    a1 = jnp.kron(eye, w1k.T).astype(compute_dtype)           # (PACK*D,  PACK*H0)
    a2 = jnp.kron(eye, w2.T).astype(compute_dtype)            # (PACK*H0, PACK*H1)
    aw = jnp.kron(eye, (ww * wf0).reshape(-1, 1)).astype(compute_dtype)    # (PACK*D,  PACK)
    ad = jnp.kron(eye, (wd * wf1).reshape(-1, 1)).astype(compute_dtype)    # (PACK*H1, PACK)
    b1p = jnp.tile(b1, PACK).reshape(1, -1).astype(jnp.float32)            # (1, PACK*H0)
    b2p = jnp.tile(b2, PACK).reshape(1, -1).astype(jnp.float32)            # (1, PACK*H1)
    bias_c = (bw * wf0 + bd * wf1 + bf).reshape(1, 1).astype(jnp.float32)  # SMEM scalar
    return a1, b1p, a2, b2p, aw, ad, bias_c


def _choose_rows_per_tile(n_rows, target_steps, max_rows):
    """Rows of the packed (R, PACK*D) view per grid step (PACK samples per row)."""
    if n_rows <= PACK:
        return n_rows                                   # single full block
    tr = -(-n_rows // target_steps)                     # ceil: aim for `target_steps` steps
    tr = ((tr + PACK - 1) // PACK) * PACK               # sublane-align the block
    tr = max(PACK, min(tr, max_rows))
    return n_rows if tr >= n_rows else tr


def wide_deep_forward(x, params, *, compute_dtype=jnp.float32,
                      target_grid_steps=8, max_rows_per_tile=4096):
    """Fused Wide&Deep forward.  x: (B, D) float32 (or bfloat16).  Returns (B, 1) float32.

    max_rows_per_tile=4096 -> up to 32768 samples (~2 MiB of f32 x) per grid step; fits the
    explicit 40 MiB VMEM limit on every generation (v7x has only 64 MiB physical).
    target_grid_steps>=8 keeps both v7x TensorCores busy via dimension_semantics.
    """
    B, D = x.shape
    a1, b1p, a2, b2p, aw, ad, bias_c = prepare_kernel_params(params, compute_dtype)

    pad = (-B) % PACK
    if pad:  # copies x; keep B a multiple of 8 upstream to stay fully zero-copy
        x = jnp.pad(x, ((0, pad), (0, 0)))
    rows = (B + pad) // PACK
    xp = x.reshape(rows, PACK * D)                      # zero-copy row-major view, lane-dense

    tr = _choose_rows_per_tile(rows, target_grid_steps, max_rows_per_tile)
    steps = -(-rows // tr)                              # ragged tail -> partial (masked) block

    h0 = b1p.shape[1] // PACK
    h1 = b2p.shape[1] // PACK
    cost = pl.CostEstimate(
        flops=2 * B * (D * h0 + h0 * h1 + D + h1),
        transcendentals=B,
        bytes_accessed=B * D * x.dtype.itemsize + B * 4
        + sum(int(a.size) * a.dtype.itemsize for a in (a1, a2, aw, ad)),
    )

    out = pl.pallas_call(
        wide_deep_kernel,
        out_shape=jax.ShapeDtypeStruct((rows, PACK), jnp.float32),
        grid=(steps,),
        in_specs=[
            # x: pipelined over batch tiles.  (Sweep pipeline_mode=pl.Buffered(3) if a
            # profile ever shows exposed DMA on this stream.)
            pl.BlockSpec((tr, PACK * D), lambda i: (i, 0)),
            pl.BlockSpec(a1.shape, lambda i: (0, 0)),          # weights: constant index map
            pl.BlockSpec(b1p.shape, lambda i: (0, 0)),          #   -> stay VMEM-resident
            pl.BlockSpec(a2.shape, lambda i: (0, 0)),
            pl.BlockSpec(b2p.shape, lambda i: (0, 0)),
            pl.BlockSpec(aw.shape, lambda i: (0, 0)),
            pl.BlockSpec(ad.shape, lambda i: (0, 0)),
            pl.BlockSpec(memory_space=pltpu.MemorySpace.SMEM),  # folded bias scalar
        ],
        out_specs=pl.BlockSpec((tr, PACK), lambda i: (i, 0)),   # packed == out.reshape view
        compiler_params=pltpu.CompilerParams(
            dimension_semantics=("parallel",),        # shard batch tiles across TCs (v7x)
            vmem_limit_bytes=40 * 1024 * 1024,        # v5e default scoped VMEM is only 16 MiB
        ),
        cost_estimate=cost,
    )(xp, a1, b1p, a2, b2p, aw, ad, bias_c)

    return out.reshape(-1, 1)[:B]                      # zero-copy view back to (B, 1)


def init_params(key, input_dim, hidden_units):
    """PyTorch nn.Linear-style uniform init; weights stored PyTorch-style as (out, in)."""
    def linear(k, fan_in, fan_out, bound_fan_in=None):
        kw, kb = jax.random.split(k)
        bound = 1.0 / jnp.sqrt(jnp.float32(bound_fan_in if bound_fan_in is not None else fan_in))
        w = jax.random.uniform(kw, (fan_out, fan_in), jnp.float32, -bound, bound)
        b = jax.random.uniform(kb, (fan_out,), jnp.float32, -bound, bound)
        return w, b

    k = jax.random.split(key, 5)
    ww, bw = linear(k[0], input_dim, 1)                            # wide: Linear(D, 1)
    # First deep layer sized to the sliced input x[:, 1:] (see TODO at top of file).
    w1, b1 = linear(k[1], input_dim - 1, hidden_units[0])
    w2, b2 = linear(k[2], hidden_units[0], hidden_units[1])
    wd, bd = linear(k[3], hidden_units[1], 1)                      # deep head: Linear(H1, 1)
    # final_linear is declared Linear(hidden_units[-1]+1, 1) in PyTorch; keep its declared
    # init bound 1/sqrt(H1+1) but retain only the 2 columns actually exercised by forward.
    wf_full, bf = linear(k[4], hidden_units[-1] + 1, 1)
    wf = wf_full[:, :2]
    return ww, bw, w1, b1, w2, b2, wd, bd, wf, bf


def reference_forward(x, params):
    """Pure-JAX reference matching the PyTorch forward (eval mode), f32-exact matmuls."""
    ww, bw, w1, b1, w2, b2, wd, bd, wf, bf = params
    hp = jax.lax.Precision.HIGHEST
    wide = jnp.dot(x, ww.T, precision=hp) + bw                     # LinearPart
    h = jnp.maximum(jnp.dot(x[:, 1:], w1.T, precision=hp) + b1, 0.0)   # DeepPart L1 + ReLU
    h = jnp.maximum(jnp.dot(h, w2.T, precision=hp) + b2, 0.0)          # DeepPart L2 + ReLU
    deep = jnp.dot(h, wd.T, precision=hp) + bd                     # DeepPart head
    combined = jnp.concatenate([wide, deep], axis=1)
    return jax.nn.sigmoid(jnp.dot(combined, wf.T, precision=hp) + bf)  # final_linear + sigmoid


if __name__ == "__main__":
    input_dim = 16
    hidden_units = (32, 16)

    key = jax.random.PRNGKey(0)
    kx, kx2, kp = jax.random.split(key, 3)
    params = init_params(kp, input_dim, hidden_units)

    fwd_f32 = jax.jit(wide_deep_forward)
    fwd_bf16 = jax.jit(lambda xx, pp: wide_deep_forward(xx, pp, compute_dtype=jnp.bfloat16))

    # (1) f32 path, batch divides evenly into grid tiles (4 grid steps).
    # Tolerance 2e-3 covers TPU default-precision differences between XLA (reference)
    # and Mosaic (kernel) matmuls; real bugs show up as O(0.1) errors.
    x = jax.random.normal(kx, (256, input_dim), jnp.float32)
    out = jax.block_until_ready(fwd_f32(x, params))
    ref = reference_forward(x, params)
    assert out.shape == (256, 1)
    assert jnp.allclose(out, ref, atol=2e-3, rtol=1e-5), "f32 mismatch vs reference"

    # (2) f32 path, ragged batch -> partial last tile (masked store), no batch padding.
    xr = jax.random.normal(kx2, (200, input_dim), jnp.float32)
    outr = jax.block_until_ready(fwd_f32(xr, params))
    refr = reference_forward(xr, params)
    assert outr.shape == (200, 1)
    assert jnp.allclose(outr, refr, atol=2e-3, rtol=1e-5), "ragged-batch mismatch vs reference"

    # (3) bf16 compute path (weights bf16, x cast in-kernel, f32 accumulation).
    outb = jax.block_until_ready(fwd_bf16(x, params))
    assert outb.shape == (256, 1)
    assert jnp.allclose(outb, ref, atol=2e-2, rtol=2e-2), "bf16 mismatch vs reference"

    print("KERNEL_OK")
</pallas_src>

<mosaic_0001>
module attributes {stable_mosaic.version = 11 : i64} {
  func.func @wide_deep_kernel(%arg0: i32, %arg1: memref<8x128xf32, #tpu.memory_space<vmem>>, %arg2: memref<128x256xf32, #tpu.memory_space<vmem>>, %arg3: memref<1x256xf32, #tpu.memory_space<vmem>>, %arg4: memref<256x128xf32, #tpu.memory_space<vmem>>, %arg5: memref<1x128xf32, #tpu.memory_space<vmem>>, %arg6: memref<128x8xf32, #tpu.memory_space<vmem>>, %arg7: memref<128x8xf32, #tpu.memory_space<vmem>>, %arg8: memref<1x1xf32, #tpu.memory_space<smem>>, %arg9: memref<8x8xf32, #tpu.memory_space<vmem>>) attributes {dimension_semantics = [#tpu.dimension_semantics<parallel>], iteration_bounds = array<i64: 4>, scalar_prefetch = 0 : i64, scratch_operands = 0 : i64, tpu.core_type = #tpu.core_type<tc>, window_params = [{transform_indices = @transform_0, window_bounds = array<i64: 8, 128>}, {pipeline_mode = #tpu.pipeline_mode<synchronous>, transform_indices = @transform_1, window_bounds = array<i64: 128, 256>}, {pipeline_mode = #tpu.pipeline_mode<synchronous>, transform_indices = @transform_2, window_bounds = array<i64: 1, 256>}, {pipeline_mode = #tpu.pipeline_mode<synchronous>, transform_indices = @transform_3, window_bounds = array<i64: 256, 128>}, {pipeline_mode = #tpu.pipeline_mode<synchronous>, transform_indices = @transform_4, window_bounds = array<i64: 1, 128>}, {pipeline_mode = #tpu.pipeline_mode<synchronous>, transform_indices = @transform_5, window_bounds = array<i64: 128, 8>}, {pipeline_mode = #tpu.pipeline_mode<synchronous>, transform_indices = @transform_6, window_bounds = array<i64: 128, 8>}, {transform_indices = @transform_7, window_bounds = array<i64: 1, 1>}, {transform_indices = @transform_8, window_bounds = array<i64: 8, 8>}]} {
    %c0 = arith.constant 0 : index
    %c0_0 = arith.constant 0 : index
    %0 = vector.load %arg1[%c0, %c0_0] : memref<8x128xf32, #tpu.memory_space<vmem>>, vector<8x128xf32>
    %c0_1 = arith.constant 0 : index
    %c0_2 = arith.constant 0 : index
    %1 = vector.load %arg2[%c0_1, %c0_2] : memref<128x256xf32, #tpu.memory_space<vmem>>, vector<128x256xf32>
    %cst = arith.constant dense<0.000000e+00> : vector<8x256xf32>
    %2 = tpu.matmul %0, %1, %cst {dimension_numbers = #tpu.dot_dimension_numbers<[1], [0], [0], [1], [0, 0, 1, 1], [], []>} : vector<8x128xf32>, vector<128x256xf32>, vector<8x256xf32> -> vector<8x256xf32>
    %c0_3 = arith.constant 0 : index
    %c0_4 = arith.constant 0 : index
    %3 = vector.load %arg3[%c0_3, %c0_4] : memref<1x256xf32, #tpu.memory_space<vmem>>, vector<1x256xf32>
    %4 = vector.broadcast %3 : vector<1x256xf32> to vector<8x256xf32>
    %5 = arith.addf %2, %4 : vector<8x256xf32>
    %cst_5 = arith.constant 0.000000e+00 : f32
    %6 = vector.broadcast %cst_5 : f32 to vector<8x256xf32>
    %7 = arith.maximumf %5, %6 : vector<8x256xf32>
    %c0_6 = arith.constant 0 : index
    %c0_7 = arith.constant 0 : index
    %8 = vector.load %arg4[%c0_6, %c0_7] : memref<256x128xf32, #tpu.memory_space<vmem>>, vector<256x128xf32>
    %cst_8 = arith.constant dense<0.000000e+00> : vector<8x128xf32>
    %9 = tpu.matmul %7, %8, %cst_8 {dimension_numbers = #tpu.dot_dimension_numbers<[1], [0], [0], [1], [0, 0, 1, 1], [], []>} : vector<8x256xf32>, vector<256x128xf32>, vector<8x128xf32> -> vector<8x128xf32>
    %c0_9 = arith.constant 0 : index
    %c0_10 = arith.constant 0 : index
    %10 = vector.load %arg5[%c0_9, %c0_10] : memref<1x128xf32, #tpu.memory_space<vmem>>, vector<1x128xf32>
    %11 = vector.broadcast %10 : vector<1x128xf32> to vector<8x128xf32>
    %12 = arith.addf %9, %11 : vector<8x128xf32>
    %cst_11 = arith.constant 0.000000e+00 : f32
    %13 = vector.broadcast %cst_11 : f32 to vector<8x128xf32>
    %14 = arith.maximumf %12, %13 : vector<8x128xf32>
    %c0_12 = arith.constant 0 : index
    %c0_13 = arith.constant 0 : index
    %15 = vector.load %arg6[%c0_12, %c0_13] : memref<128x8xf32, #tpu.memory_space<vmem>>, vector<128x8xf32>
    %cst_14 = arith.constant dense<0.000000e+00> : vector<8x8xf32>
    %16 = tpu.matmul %0, %15, %cst_14 {dimension_numbers = #tpu.dot_dimension_numbers<[1], [0], [0], [1], [0, 0, 1, 1], [], []>} : vector<8x128xf32>, vector<128x8xf32>, vector<8x8xf32> -> vector<8x8xf32>
    %c0_15 = arith.constant 0 : index
    %c0_16 = arith.constant 0 : index
    %17 = vector.load %arg7[%c0_15, %c0_16] : memref<128x8xf32, #tpu.memory_space<vmem>>, vector<128x8xf32>
    %cst_17 = arith.constant dense<0.000000e+00> : vector<8x8xf32>
    %18 = tpu.matmul %14, %17, %cst_17 {dimension_numbers = #tpu.dot_dimension_numbers<[1], [0], [0], [1], [0, 0, 1, 1], [], []>} : vector<8x128xf32>, vector<128x8xf32>, vector<8x8xf32> -> vector<8x8xf32>
    %19 = arith.addf %16, %18 : vector<8x8xf32>
    %c0_18 = arith.constant 0 : index
    %c0_19 = arith.constant 0 : index
    %20 = memref.load %arg8[%c0_18, %c0_19] : memref<1x1xf32, #tpu.memory_space<smem>>
    %21 = vector.broadcast %20 : f32 to vector<8x8xf32>
    %22 = arith.addf %19, %21 : vector<8x8xf32>
    %23 = arith.negf %22 : vector<8x8xf32>
    %24 = math.exp %23 : vector<8x8xf32>
    %cst_20 = arith.constant 1.000000e+00 : f32
    %25 = vector.broadcast %cst_20 : f32 to vector<8x8xf32>
    %26 = arith.addf %25, %24 : vector<8x8xf32>
    %27 = arith.divf %25, %26 : vector<8x8xf32>
    %c0_21 = arith.constant 0 : index
    %c0_22 = arith.constant 0 : index
    %28 = vector.load %arg9[%c0_21, %c0_22] : memref<8x8xf32, #tpu.memory_space<vmem>>, vector<8x8xf32>
    tpu.vector_store %arg9[%c0_21, %c0_22], %27 {strides = array<i32>} : memref<8x8xf32, #tpu.memory_space<vmem>>, vector<8x8xf32>,
    return
  }
  func.func @transform_0(%arg0: i32) -> (i32, i32) {
    %c0_i32 = arith.constant 0 : i32
    %c0_i32_0 = arith.constant 0 : i32
    return %arg0, %c0_i32 : i32, i32
  }
  func.func @transform_1(%arg0: i32) -> (i32, i32) {
    %c0_i32 = arith.constant 0 : i32
    %c0_i32_0 = arith.constant 0 : i32
    %c0_i32_1 = arith.constant 0 : i32
    return %c0_i32, %c0_i32_0 : i32, i32
  }
  func.func @transform_2(%arg0: i32) -> (i32, i32) {
    %c0_i32 = arith.constant 0 : i32
    %c0_i32_0 = arith.constant 0 : i32
    %c0_i32_1 = arith.constant 0 : i32
    return %c0_i32, %c0_i32_0 : i32, i32
  }
  func.func @transform_3(%arg0: i32) -> (i32, i32) {
    %c0_i32 = arith.constant 0 : i32
    %c0_i32_0 = arith.constant 0 : i32
    %c0_i32_1 = arith.constant 0 : i32
    return %c0_i32, %c0_i32_0 : i32, i32
  }
  func.func @transform_4(%arg0: i32) -> (i32, i32) {
    %c0_i32 = arith.constant 0 : i32
    %c0_i32_0 = arith.constant 0 : i32
    %c0_i32_1 = arith.constant 0 : i32
    return %c0_i32, %c0_i32_0 : i32, i32
  }
  func.func @transform_5(%arg0: i32) -> (i32, i32) {
    %c0_i32 = arith.constant 0 : i32
    %c0_i32_0 = arith.constant 0 : i32
    %c0_i32_1 = arith.constant 0 : i32
    return %c0_i32, %c0_i32_0 : i32, i32
  }
  func.func @transform_6(%arg0: i32) -> (i32, i32) {
    %c0_i32 = arith.constant 0 : i32
    %c0_i32_0 = arith.constant 0 : i32
    %c0_i32_1 = arith.constant 0 : i32
    return %c0_i32, %c0_i32_0 : i32, i32
  }
  func.func @transform_7(%arg0: i32) -> (i32, i32) {
    %c0_i32 = arith.constant 0 : i32
    %c0_i32_0 = arith.constant 0 : i32
    %c0_i32_1 = arith.constant 0 : i32
    return %c0_i32, %c0_i32_0 : i32, i32
  }
  func.func @transform_8(%arg0: i32) -> (i32, i32) {
    %c0_i32 = arith.constant 0 : i32
    %c0_i32_0 = arith.constant 0 : i32
    return %arg0, %c0_i32 : i32, i32
  }
}

</mosaic_0001>

<llo_original>
// kernel: tile.13
$region0: #{tile.13}
  #allocation0 [shape = 's32[1]{0}', space=sflag, size = 0x4, scoped, tag = 'scoped memory for tile.13']
  %s0 = inlined_call_operand.vmem [shape: f32[32], index: 0, kind: input, shape index: {}]
  %s1 = inlined_call_operand.vmem [shape: f32[8,32], index: 1, kind: output, shape index: {}]
  // Predicated region
  $region2: #{tile.13} parent=0 // pred_check
    _
  $region3: #{tile.13} parent=0 // pred_check_branch
    %3 = sbr.rel (0) target = $region5
  $region4: #{tile.13} parent=0 // pred_region
    _
  $region5: #{tile.13} parent=0 // pred_fallthru
    _
  %v4 = vld [vmem:[%s0] ss:$0 sm:$0xff]
  %5 = vst [vmem:[%s1] sm:$0xff] %v4

// kernel: tile.14
$region0: #{tile.14}
  %s0 = inlined_call_operand.vmem [shape: f32[8,32], index: 0, kind: input, shape index: {}]
  %s1 = inlined_call_operand.vmem [shape: f32[1,256], index: 1, kind: output, shape index: {}]
  $region1: #{tile.14} parent=0
    #allocation0 [shape = 'u8[8192]{0}', space=vmem, size = 0x2000, scoped, tag = 'scoped mem for output reshape']
    %s2 = smov 3
    %v3 = vld [vmem:[%s0] ss:$4 sm:%s2]
    %vm4 = vcmask 261120
    %5 = vst.msk [vmem:[#allocation0] ss:$8 sm:$0x3] %vm4, %v3
    %s6 = scalar_lea.vmem %s0, 3
    %s7 = smov 3
    %v8 = vld [vmem:[%s6] ss:$4 sm:%s7]
    %9 = vrot.lane.b32.xlu0 %v8, 96
    %v10 = vpop.permute.xlu0 %9
    %vm11 = vcmask 1048320
    %12 = vst.msk [vmem:[#allocation0] ss:$8 sm:$0x3] %vm11, %v10
    %s13 = scalar_lea.vmem %s0, 2
    %s14 = smov 3
    %v15 = vld [vmem:[%s13] ss:$4 sm:%s14]
    %16 = vrot.lane.b32.xlu0 %v15, 64
    %v17 = vpop.permute.xlu0 %16
    %vm18 = vcmask 785920
    %19 = vst.msk [vmem:[#allocation0] ss:$8 sm:$0x3] %vm18, %v17
    %s20 = scalar_lea.vmem %s0, 1
    %s21 = smov 3
    %v22 = vld [vmem:[%s20] ss:$4 sm:%s21]
    %23 = vrot.lane.b32.xlu0 %v22, 32
    %v24 = vpop.permute.xlu0 %23
    %vm25 = vcmask 523520
    %26 = vst.msk [vmem:[#allocation0] ss:$8 sm:$0x3] %vm25, %v24
    %s28 = sshllo.u32 0, 1
    %v30 = vld [vmem:[#allocation0] sm:%s28]
    %s31 = sshllo.u32 0, 1
    %32 = vst [vmem:[%s1] sm:%s31] %v30
    %s33 = scalar_lea.vmem [#allocation0], 8
    %v34 = vld [vmem:[%s33] sm:%s28]
    %s35 = sshllo.u32 0, 1
    %s36 = scalar_lea.vmem %s1, 1
    %37 = vst [vmem:[%s36] sm:%s35] %v34

// kernel: tile.18
$region0: #{tile.18}
  #allocation0 [shape = 's32[1]{0}', space=sflag, size = 0x4, scoped, tag = 'scoped memory for tile.18']
  %s0 = inlined_call_operand.vmem [shape: f32[16], index: 0, kind: input, shape index: {}]
  %s1 = inlined_call_operand.vmem [shape: f32[8,16], index: 1, kind: output, shape index: {}]
  // Predicated region
  $region2: #{tile.18} parent=0 // pred_check
    _
  $region3: #{tile.18} parent=0 // pred_check_branch
    %3 = sbr.rel (0) target = $region5
  $region4: #{tile.18} parent=0 // pred_region
    _
  $region5: #{tile.18} parent=0 // pred_fallthru
    _
  %v4 = vld [vmem:[%s0] ss:$0 sm:$0xff]
  %5 = vst [vmem:[%s1] sm:$0xff] %v4

// kernel: tile.19
$region0: #{tile.19}
  %s0 = inlined_call_operand.vmem [shape: f32[8,16], index: 0, kind: input, shape index: {}]
  %s1 = inlined_call_operand.vmem [shape: f32[1,128], index: 1, kind: output, shape index: {}]
  $region1: #{tile.19} parent=0
    #allocation0 [shape = 'u8[4096]{0}', space=vmem, size = 0x1000, scoped, tag = 'scoped mem for output reshape']
    %v2 = vld [vmem:[%s0] sm:$0x1]
    %vm3 = vcmask 130048
    %4 = vst.msk [vmem:[#allocation0] sm:$0x1] %vm3, %v2
    %s5 = scalar_lea.vmem %s0, 7
    %v6 = vld [vmem:[%s5] sm:$0x1]
    %7 = vrot.lane.b32.xlu0 %v6, 112
    %v8 = vpop.permute.xlu0 %7
    %vm9 = vcmask 1048448
    %10 = vst.msk [vmem:[#allocation0] sm:$0x1] %vm9, %v8
    %s11 = scalar_lea.vmem %s0, 6
    %v12 = vld [vmem:[%s11] sm:$0x1]
    %13 = vrot.lane.b32.xlu0 %v12, 96
    %v14 = vpop.permute.xlu0 %13
    %vm15 = vcmask 917248
    %16 = vst.msk [vmem:[#allocation0] sm:$0x1] %vm15, %v14
    %s17 = scalar_lea.vmem %s0, 5
    %v18 = vld [vmem:[%s17] sm:$0x1]
    %19 = vrot.lane.b32.xlu0 %v18, 80
    %v20 = vpop.permute.xlu0 %19
    %vm21 = vcmask 786048
    %22 = vst.msk [vmem:[#allocation0] sm:$0x1] %vm21, %v20
    %s23 = scalar_lea.vmem %s0, 4
    %v24 = vld [vmem:[%s23] sm:$0x1]
    %25 = vrot.lane.b32.xlu0 %v24, 64
    %v26 = vpop.permute.xlu0 %25
    %vm27 = vcmask 654848
    %28 = vst.msk [vmem:[#allocation0] sm:$0x1] %vm27, %v26
    %s29 = scalar_lea.vmem %s0, 3
    %v30 = vld [vmem:[%s29] sm:$0x1]
    %31 = vrot.lane.b32.xlu0 %v30, 48
    %v32 = vpop.permute.xlu0 %31
    %vm33 = vcmask 523648
    %34 = vst.msk [vmem:[#allocation0] sm:$0x1] %vm33, %v32
    %s35 = scalar_lea.vmem %s0, 2
    %v36 = vld [vmem:[%s35] sm:$0x1]
    %37 = vrot.lane.b32.xlu0 %v36, 32
    %v38 = vpop.permute.xlu0 %37
    %vm39 = vcmask 392448
    %40 = vst.msk [vmem:[#allocation0] sm:$0x1] %vm39, %v38
    %s41 = scalar_lea.vmem %s0, 1
    %v42 = vld [vmem:[%s41] sm:$0x1]
    %43 = vrot.lane.b32.xlu0 %v42, 16
    %v44 = vpop.permute.xlu0 %43
    %vm45 = vcmask 261248
    %46 = vst.msk [vmem:[#allocation0] sm:$0x1] %vm45, %v44
    %s48 = sshllo.u32 0, 1
    %v50 = vld [vmem:[#allocation0] sm:%s48]
    %s51 = sshllo.u32 0, 1
    %52 = vst [vmem:[%s1] sm:%s51] %v50

// kernel: wide_deep_forward.1
$region0: #{wide_deep_forward.1}
  #allocation0 [shape = 'u32[]', space=smem, size = 0x4, offset = 0x4, fixed_abs, tag = 'smem constant byte address 0x4 - core index']
  #allocation1 [shape = 'u32[144,128]{1,0:T(1,128)}', space=vmem, size = 0x12000, scoped, tag = 'internal scratch']
  #allocation2 [shape = 'f32[1,1]{1,0:T(1,128)S(6)}', space=smem, size = 0x200, scoped, tag = 'scoped memory for wide_deep_forward.1']
  %s0 = inlined_call_operand.vmem [shape: f32[32,128], index: 0, kind: input, shape index: {}]
  %s1 = inlined_call_operand.vmem [shape: f32[128,256], index: 1, kind: input, shape index: {}]
  %s2 = inlined_call_operand.vmem [shape: f32[1,256], index: 2, kind: input, shape index: {}]
  %s3 = inlined_call_operand.vmem [shape: f32[256,128], index: 3, kind: input, shape index: {}]
  %s4 = inlined_call_operand.vmem [shape: f32[1,128], index: 4, kind: input, shape index: {}]
  %s5 = inlined_call_operand.vmem [shape: f32[128,8], index: 5, kind: input, shape index: {}]
  %s6 = inlined_call_operand.vmem [shape: f32[128,8], index: 6, kind: input, shape index: {}]
  %s7 = inlined_call_operand.<no memory space> [shape: f32[1,1], index: 7, kind: input, shape index: {}]
  %s8 = inlined_call_operand.vmem [shape: f32[32,8], index: 8, kind: output, shape index: {}]
  %s9 = sld [smem:[#allocation0]]
  $region65: #{wide_deep_forward.1} parent=0
    _
  %s11 = ssub.s32 1, %s9
  %s12 = scalar_select 0, %s11, %s9
  %13 = sst [smem:[#allocation2]] %s7
  loop: start=0, step=1, limit=6
  $region2: #{wide_deep_forward.1} parent=0 // loop_pre_header
    _
  $region3: #{wide_deep_forward.1} parent=0 // loop_header
    %s15 = sphi 0, %s19
    %p16 = scmp.ge.s32.totalorder %s15, 6
    %s25 = sphi 0, %s27
    %s28 = sphi 0, %s25
    %s29 = sphi 0, %s28
    %s45 = sphi 0, %s29
    %s49 = sphi 0, %s49
    %s51 = sphi 0, %s49
    %s52 = sphi 0, %s51
    %s66 = sphi 0, %s52
    %s70 = sphi 0, %s70
    %s72 = sphi 0, %s70
    %s73 = sphi 0, %s72
    %s87 = sphi 0, %s73
    %s91 = sphi 0, %s91
    %s93 = sphi 0, %s91
    %s94 = sphi 0, %s93
    %s108 = sphi 0, %s94
    %s112 = sphi 0, %s112
    %s114 = sphi 0, %s112
    %s115 = sphi 0, %s114
    %s129 = sphi 0, %s115
    %s133 = sphi 0, %s133
    %s135 = sphi 0, %s133
    %s136 = sphi 0, %s135
    %s150 = sphi 0, %s136
    %s154 = sphi 0, %s154
    %s156 = sphi 0, %s154
    %s157 = sphi 0, %s156
    %s171 = sphi 0, %s157
    %s175 = sphi 0, %s175
    %s177 = sphi 0, %s175
    %s178 = sphi 0, %s177
    %s192 = sphi 0, %s178
    %s198 = sphi 0, %s200
    %s201 = sphi 0, %s198
    %s202 = sphi 0, %s201
    %s218 = sphi 0, %s202
  $region4: #{wide_deep_forward.1} parent=0 // loop_header_branch
    %18 = sbr.rel (%p16) target = $region8
  $region5: #{wide_deep_forward.1} parent=0 // loop_body
    %s20 = ssub.s32 %s15, 1
    %s21 = ssub.s32 %s15, 2
    %s22 = sadd.s32 %s15, 1
    %s23 = ssub.s32 %s15, %s22
    %p24 = scmp.eq.s32.totalorder %s23, 0
    %s26 = sadd.s32 %s25, 1
    %s27 = scalar_select %p24, %s25, %s26
    %p30 = pneg %p24
    %p31 = scmp.eq.s32.totalorder %s15, 3
    %p32 = por %p30, %p31
    %p33 = scmp.ne.s32.totalorder %s25, %s28
    %p34 = scmp.eq.s32.totalorder %s15, 0
    %p35 = por %p33, %p34
    %p36 = scmp.ne.s32.totalorder %s25, %s28
    %p37 = scmp.eq.s32.totalorder %s20, 3
    %p38 = por %p36, %p37
    %p39 = scmp.ne.s32.totalorder %s28, %s29
    %p40 = scmp.eq.s32.totalorder %s20, 0
    %p41 = por %p39, %p40
    %p42 = scmp.ne.s32.totalorder %s28, %s29
    %p43 = scmp.eq.s32.totalorder %s21, 3
    %p44 = por %p42, %p43
    %p46 = scmp.ne.s32.totalorder %s29, %s45
    %p47 = scmp.eq.s32.totalorder %s21, 0
    %p48 = por %p46, %p47
    %s50 = sadd.s32 %s49, 1
    %p53 = scmp.eq.s32.totalorder %s15, 3
    %p54 = scmp.ne.s32.totalorder %s49, %s51
    %p55 = scmp.eq.s32.totalorder %s15, 0
    %p56 = por %p54, %p55
    %p57 = scmp.ne.s32.totalorder %s49, %s51
    %p58 = scmp.eq.s32.totalorder %s20, 3
    %p59 = por %p57, %p58
    %p60 = scmp.ne.s32.totalorder %s51, %s52
    %p61 = scmp.eq.s32.totalorder %s20, 0
    %p62 = por %p60, %p61
    %p63 = scmp.ne.s32.totalorder %s51, %s52
    %p64 = scmp.eq.s32.totalorder %s21, 3
    %p65 = por %p63, %p64
    %p67 = scmp.ne.s32.totalorder %s52, %s66
    %p68 = scmp.eq.s32.totalorder %s21, 0
    %p69 = por %p67, %p68
    %s71 = sadd.s32 %s70, 1
    %p74 = scmp.eq.s32.totalorder %s15, 3
    %p75 = scmp.ne.s32.totalorder %s70, %s72
    %p76 = scmp.eq.s32.totalorder %s15, 0
    %p77 = por %p75, %p76
    %p78 = scmp.ne.s32.totalorder %s70, %s72
    %p79 = scmp.eq.s32.totalorder %s20, 3
    %p80 = por %p78, %p79
    %p81 = scmp.ne.s32.totalorder %s72, %s73
    %p82 = scmp.eq.s32.totalorder %s20, 0
    %p83 = por %p81, %p82
    %p84 = scmp.ne.s32.totalorder %s72, %s73
    %p85 = scmp.eq.s32.totalorder %s21, 3
    %p86 = por %p84, %p85
    %p88 = scmp.ne.s32.totalorder %s73, %s87
    %p89 = scmp.eq.s32.totalorder %s21, 0
    %p90 = por %p88, %p89
    %s92 = sadd.s32 %s91, 1
    %p95 = scmp.eq.s32.totalorder %s15, 3
    %p96 = scmp.ne.s32.totalorder %s91, %s93
    %p97 = scmp.eq.s32.totalorder %s15, 0
    %p98 = por %p96, %p97
    %p99 = scmp.ne.s32.totalorder %s91, %s93
    %p100 = scmp.eq.s32.totalorder %s20, 3
    %p101 = por %p99, %p100
    %p102 = scmp.ne.s32.totalorder %s93, %s94
    %p103 = scmp.eq.s32.totalorder %s20, 0
    %p104 = por %p102, %p103
    %p105 = scmp.ne.s32.totalorder %s93, %s94
    %p106 = scmp.eq.s32.totalorder %s21, 3
    %p107 = por %p105, %p106
    %p109 = scmp.ne.s32.totalorder %s94, %s108
    %p110 = scmp.eq.s32.totalorder %s21, 0
    %p111 = por %p109, %p110
    %s113 = sadd.s32 %s112, 1
    %p116 = scmp.eq.s32.totalorder %s15, 3
    %p117 = scmp.ne.s32.totalorder %s112, %s114
    %p118 = scmp.eq.s32.totalorder %s15, 0
    %p119 = por %p117, %p118
    %p120 = scmp.ne.s32.totalorder %s112, %s114
    %p121 = scmp.eq.s32.totalorder %s20, 3
    %p122 = por %p120, %p121
    %p123 = scmp.ne.s32.totalorder %s114, %s115
    %p124 = scmp.eq.s32.totalorder %s20, 0
    %p125 = por %p123, %p124
    %p126 = scmp.ne.s32.totalorder %s114, %s115
    %p127 = scmp.eq.s32.totalorder %s21, 3
    %p128 = por %p126, %p127
    %p130 = scmp.ne.s32.totalorder %s115, %s129
    %p131 = scmp.eq.s32.totalorder %s21, 0
    %p132 = por %p130, %p131
    %s134 = sadd.s32 %s133, 1
    %p137 = scmp.eq.s32.totalorder %s15, 3
    %p138 = scmp.ne.s32.totalorder %s133, %s135
    %p139 = scmp.eq.s32.totalorder %s15, 0
    %p140 = por %p138, %p139
    %p141 = scmp.ne.s32.totalorder %s133, %s135
    %p142 = scmp.eq.s32.totalorder %s20, 3
    %p143 = por %p141, %p142
    %p144 = scmp.ne.s32.totalorder %s135, %s136
    %p145 = scmp.eq.s32.totalorder %s20, 0
    %p146 = por %p144, %p145
    %p147 = scmp.ne.s32.totalorder %s135, %s136
    %p148 = scmp.eq.s32.totalorder %s21, 3
    %p149 = por %p147, %p148
    %p151 = scmp.ne.s32.totalorder %s136, %s150
    %p152 = scmp.eq.s32.totalorder %s21, 0
    %p153 = por %p151, %p152
    %s155 = sadd.s32 %s154, 1
    %p158 = scmp.eq.s32.totalorder %s15, 3
    %p159 = scmp.ne.s32.totalorder %s154, %s156
    %p160 = scmp.eq.s32.totalorder %s15, 0
    %p161 = por %p159, %p160
    %p162 = scmp.ne.s32.totalorder %s154, %s156
    %p163 = scmp.eq.s32.totalorder %s20, 3
    %p164 = por %p162, %p163
    %p165 = scmp.ne.s32.totalorder %s156, %s157
    %p166 = scmp.eq.s32.totalorder %s20, 0
    %p167 = por %p165, %p166
    %p168 = scmp.ne.s32.totalorder %s156, %s157
    %p169 = scmp.eq.s32.totalorder %s21, 3
    %p170 = por %p168, %p169
    %p172 = scmp.ne.s32.totalorder %s157, %s171
    %p173 = scmp.eq.s32.totalorder %s21, 0
    %p174 = por %p172, %p173
    %s176 = sadd.s32 %s175, 1
    %p179 = scmp.eq.s32.totalorder %s15, 3
    %p180 = scmp.ne.s32.totalorder %s175, %s177
    %p181 = scmp.eq.s32.totalorder %s15, 0
    %p182 = por %p180, %p181
    %p183 = scmp.ne.s32.totalorder %s175, %s177
    %p184 = scmp.eq.s32.totalorder %s20, 3
    %p185 = por %p183, %p184
    %p186 = scmp.ne.s32.totalorder %s177, %s178
    %p187 = scmp.eq.s32.totalorder %s20, 0
    %p188 = por %p186, %p187
    %p189 = scmp.ne.s32.totalorder %s177, %s178
    %p190 = scmp.eq.s32.totalorder %s21, 3
    %p191 = por %p189, %p190
    %p193 = scmp.ne.s32.totalorder %s178, %s192
    %p194 = scmp.eq.s32.totalorder %s21, 0
    %p195 = por %p193, %p194
    %s196 = ssub.s32 %s15, %s22
    %p197 = scmp.eq.s32.totalorder %s196, 0
    %s199 = sadd.s32 %s198, 1
    %s200 = scalar_select %p197, %s198, %s199
    %p203 = pneg %p197
    %p204 = scmp.eq.s32.totalorder %s15, 3
    %p205 = por %p203, %p204
    %p206 = scmp.ne.s32.totalorder %s198, %s201
    %p207 = scmp.eq.s32.totalorder %s15, 0
    %p208 = por %p206, %p207
    %p209 = scmp.ne.s32.totalorder %s198, %s201
    %p210 = scmp.eq.s32.totalorder %s20, 3
    %p211 = por %p209, %p210
    %p212 = scmp.ne.s32.totalorder %s201, %s202
    %p213 = scmp.eq.s32.totalorder %s20, 0
    %p214 = por %p212, %p213
    %p215 = scmp.ne.s32.totalorder %s201, %s202
    %p216 = scmp.eq.s32.totalorder %s21, 3
    %p217 = por %p215, %p216
    %p219 = scmp.ne.s32.totalorder %s202, %s218
    %p220 = scmp.eq.s32.totalorder %s21, 0
    %p221 = por %p219, %p220
    %p222 = scmp.le.s32.totalorder 1, %s15
    %p223 = scmp.lt.s32.totalorder %s15, 5
    %p224 = pnand %p222, %p223
    %p225 = pneg %p224
    // Predicated region
    $region9: #{wide_deep_forward.1} parent=5 // pred_check
      _
    $region10: #{wide_deep_forward.1} parent=5 // pred_check_branch
      %227 = sbr.rel (%p224) target = $region12
    $region11: #{wide_deep_forward.1} parent=5 // pred_region
      %s228 = ssub.s32 %s15, 1
      // Predicated region
      $region13: #{wide_deep_forward.1} parent=11 // pred_check
        %p229 = pneg %p62
      $region14: #{wide_deep_forward.1} parent=11 // pred_check_branch
        %231 = sbr.rel (%p229) target = $region16
      $region15: #{wide_deep_forward.1} parent=11 // pred_region
        _
      $region16: #{wide_deep_forward.1} parent=11 // pred_fallthru
        _
      // Predicated region
      $region17: #{wide_deep_forward.1} parent=11 // pred_check
        %p232 = pneg %p83
      $region18: #{wide_deep_forward.1} parent=11 // pred_check_branch
        %234 = sbr.rel (%p232) target = $region20
      $region19: #{wide_deep_forward.1} parent=11 // pred_region
        _
      $region20: #{wide_deep_forward.1} parent=11 // pred_fallthru
        _
      // Predicated region
      $region21: #{wide_deep_forward.1} parent=11 // pred_check
        %p235 = pneg %p104
      $region22: #{wide_deep_forward.1} parent=11 // pred_check_branch
        %237 = sbr.rel (%p235) target = $region24
      $region23: #{wide_deep_forward.1} parent=11 // pred_region
        _
      $region24: #{wide_deep_forward.1} parent=11 // pred_fallthru
        _
      // Predicated region
      $region25: #{wide_deep_forward.1} parent=11 // pred_check
        %p238 = pneg %p125
      $region26: #{wide_deep_forward.1} parent=11 // pred_check_branch
        %240 = sbr.rel (%p238) target = $region28
      $region27: #{wide_deep_forward.1} parent=11 // pred_region
        _
      $region28: #{wide_deep_forward.1} parent=11 // pred_fallthru
        _
      // Predicated region
      $region29: #{wide_deep_forward.1} parent=11 // pred_check
        %p241 = pneg %p146
      $region30: #{wide_deep_forward.1} parent=11 // pred_check_branch
        %243 = sbr.rel (%p241) target = $region32
      $region31: #{wide_deep_forward.1} parent=11 // pred_region
        _
      $region32: #{wide_deep_forward.1} parent=11 // pred_fallthru
        _
      // Predicated region
      $region33: #{wide_deep_forward.1} parent=11 // pred_check
        %p244 = pneg %p167
      $region34: #{wide_deep_forward.1} parent=11 // pred_check_branch
        %246 = sbr.rel (%p244) target = $region36
      $region35: #{wide_deep_forward.1} parent=11 // pred_region
        _
      $region36: #{wide_deep_forward.1} parent=11 // pred_fallthru
        _
      // Predicated region
      $region37: #{wide_deep_forward.1} parent=11 // pred_check
        %p247 = pneg %p188
      $region38: #{wide_deep_forward.1} parent=11 // pred_check_branch
        %249 = sbr.rel (%p247) target = $region40
      $region39: #{wide_deep_forward.1} parent=11 // pred_region
        _
      $region40: #{wide_deep_forward.1} parent=11 // pred_fallthru
        _
    $region12: #{wide_deep_forward.1} parent=5 // pred_fallthru
      _
    %p250 = scmp.lt.s32.totalorder %s15, 4
    // Predicated region
    $region41: #{wide_deep_forward.1} parent=5 // pred_check
      %p251 = pneg %p250
    $region42: #{wide_deep_forward.1} parent=5 // pred_check_branch
      %253 = sbr.rel (%p251) target = $region44
    $region43: #{wide_deep_forward.1} parent=5 // pred_region
      // Predicated region
      $region45: #{wide_deep_forward.1} parent=43 // pred_check
        %p254 = pneg %p35
      $region46: #{wide_deep_forward.1} parent=43 // pred_check_branch
        %256 = sbr.rel (%p254) target = $region48
      $region47: #{wide_deep_forward.1} parent=43 // pred_region
        %p257 = scmp.lt.s32.totalorder %s15, 3
        %s258 = scalar_select %p257, %s15, 3
        %s259 = smul.addr %s258, 8
        %s260 = scalar_lea.vmem %s0, %s259
      $region48: #{wide_deep_forward.1} parent=43 // pred_fallthru
        _
    $region44: #{wide_deep_forward.1} parent=5 // pred_fallthru
      _
    %p261 = scmp.le.s32.totalorder 1, %s15
    %p262 = scmp.lt.s32.totalorder %s15, 5
    %p263 = pnand %p261, %p262
    %p264 = pneg %p263
    // Predicated region
    $region49: #{wide_deep_forward.1} parent=5 // pred_check
      _
    $region50: #{wide_deep_forward.1} parent=5 // pred_check_branch
      %266 = sbr.rel (%p263) target = $region52
    $region51: #{wide_deep_forward.1} parent=5 // pred_region
      %s267 = ssub.s32 %s15, 1
      %p268 = scmp.lt.s32.totalorder %s20, 3
      %s269 = scalar_select %p268, %s20, 3
      %s270 = smul.addr %s269, 8
      %s271 = scalar_lea.vmem %s0, %s270
      %p272 = pneg %p41
      %p273 = pneg %p38
      %p274 = pneg %p62
      %p275 = pneg %p59
      %p276 = pneg %p83
      %p277 = pneg %p80
      %p278 = pneg %p104
      %p279 = pneg %p101
      %p280 = pneg %p125
      %p281 = pneg %p122
      %p282 = pneg %p146
      %p283 = pneg %p143
      %p284 = pneg %p167
      %p285 = pneg %p164
      %p286 = pneg %p188
      %p287 = pneg %p185
      %p288 = pneg %p214
      %p289 = pneg %p211
      %p290 = scmp.lt.s32.totalorder %s20, 3
      %s291 = scalar_select %p290, %s20, 3
      %s292 = smul.addr %s291, 8
      %s293 = scalar_lea.vmem %s8, %s292
      %p294 = scmp.lt.s32.totalorder %s20, 3
      %s295 = scalar_select %p294, %s20, 3
      %s296 = smul.addr %s295, 8
      %s297 = scalar_lea.vmem %s0, %s296
      %p298 = scmp.lt.s32.totalorder %s20, 3
      %s299 = scalar_select %p298, %s20, 3
      %s300 = smul.addr %s299, 8
      %s301 = scalar_lea.vmem %s8, %s300
      %v302 = vld [vmem:[%s297] sm:$0xff]
      %v303 = vld [vmem:[%s1] sm:$0xff]
      %v304 = vld [vmem:[%s1 + $0x8] sm:$0xff]
      %v305 = vld [vmem:[%s1 + $0x10] sm:$0xff]
      %v306 = vld [vmem:[%s1 + $0x18] sm:$0xff]
      %v307 = vld [vmem:[%s1 + $0x20] sm:$0xff]
      %v308 = vld [vmem:[%s1 + $0x28] sm:$0xff]
      %v309 = vld [vmem:[%s1 + $0x30] sm:$0xff]
      %v310 = vld [vmem:[%s1 + $0x38] sm:$0xff]
      %v311 = vld [vmem:[%s1 + $0x40] sm:$0xff]
      %v312 = vld [vmem:[%s1 + $0x48] sm:$0xff]
      %v313 = vld [vmem:[%s1 + $0x50] sm:$0xff]
      %v314 = vld [vmem:[%s1 + $0x58] sm:$0xff]
      %v315 = vld [vmem:[%s1 + $0x60] sm:$0xff]
      %v316 = vld [vmem:[%s1 + $0x68] sm:$0xff]
      %v317 = vld [vmem:[%s1 + $0x70] sm:$0xff]
      %v318 = vld [vmem:[%s1 + $0x78] sm:$0xff]
      %v319 = vld [vmem:[%s1 + $0x80] sm:$0xff]
      %v320 = vld [vmem:[%s1 + $0x88] sm:$0xff]
      %v321 = vld [vmem:[%s1 + $0x90] sm:$0xff]
      %v322 = vld [vmem:[%s1 + $0x98] sm:$0xff]
      %v323 = vld [vmem:[%s1 + $0xa0] sm:$0xff]
      %v324 = vld [vmem:[%s1 + $0xa8] sm:$0xff]
      %v325 = vld [vmem:[%s1 + $0xb0] sm:$0xff]
      %v326 = vld [vmem:[%s1 + $0xb8] sm:$0xff]
      %v327 = vld [vmem:[%s1 + $0xc0] sm:$0xff]
      %v328 = vld [vmem:[%s1 + $0xc8] sm:$0xff]
      %v329 = vld [vmem:[%s1 + $0xd0] sm:$0xff]
      %v330 = vld [vmem:[%s1 + $0xd8] sm:$0xff]
      %v331 = vld [vmem:[%s1 + $0xe0] sm:$0xff]
      %v332 = vld [vmem:[%s1 + $0xe8] sm:$0xff]
      %v333 = vld [vmem:[%s1 + $0xf0] sm:$0xff]
      %v334 = vld [vmem:[%s1 + $0xf8] sm:$0xff]
      %v335 = vld [vmem:[%s2] sm:$0x3]
      %v337 = vlaneseq
      %v338 = vshrl.u32 %v337, 7
      %v339 = vsub.s32 0, %v338
      %v340 = vrot.slane %v335, %v339
      %v341 = vlaneseq
      %v342 = vshrl.u32 %v341, 7
      %v343 = vsub.s32 1, %v342
      %v344 = vrot.slane %v335, %v343
      %347 = vmatprep.subr.mxu0 %v304
      %348 = vmatpush1.msra.mxu0 %v303
      %349 = vmatprep.subr.mxu0 %v306
      %350 = vmatpush1.msra.mxu0 %v305
      %351 = vmatprep.subr.mxu0 %v308
      %352 = vmatpush1.msra.mxu0 %v307
      %353 = vmatprep.subr.mxu0 %v310
      %354 = vmatpush1.msra.mxu0 %v309
      %355 = vmatprep.subr.mxu0 %v312
      %356 = vmatpush1.msra.mxu0 %v311
      %357 = vmatprep.subr.mxu0 %v314
      %358 = vmatpush1.msra.mxu0 %v313
      %359 = vmatprep.subr.mxu0 %v316
      %360 = vmatpush1.msra.mxu0 %v315
      %361 = vmatprep.subr.mxu0 %v318
      %362 = vmatpush1.msra.mxu0 %v317
      %363 = vmatprep.subr.mxu0 %v320
      %364 = vmatpush1.msra.mxu0 %v319
      %365 = vmatprep.subr.mxu0 %v322
      %366 = vmatpush1.msra.mxu0 %v321
      %367 = vmatprep.subr.mxu0 %v324
      %368 = vmatpush1.msra.mxu0 %v323
      %369 = vmatprep.subr.mxu0 %v326
      %370 = vmatpush1.msra.mxu0 %v325
      %371 = vmatprep.subr.mxu0 %v328
      %372 = vmatpush1.msra.mxu0 %v327
      %373 = vmatprep.subr.mxu0 %v330
      %374 = vmatpush1.msra.mxu0 %v329
      %375 = vmatprep.subr.mxu0 %v332
      %376 = vmatpush1.msra.mxu0 %v331
      %377 = vmatprep.subr.mxu0 %v334
      %378 = vmatpush1.msra.mxu0 %v333
      %379 = vmatprep.subr.mxu0 0.0
      %380 = vmatpush1.msra.mxu0 0.0
      %381 = vmatprep.subr.mxu0 0.0
      %382 = vmatpush1.msra.mxu0 0.0
      %383 = vmatprep.subr.mxu0 0.0
      %384 = vmatpush1.msra.mxu0 0.0
      %385 = vmatprep.subr.mxu0 0.0
      %386 = vmatpush1.msra.mxu0 0.0
      %387 = vmatprep.subr.mxu0 0.0
      %388 = vmatpush1.msra.mxu0 0.0
      %389 = vmatprep.subr.mxu0 0.0
      %390 = vmatpush1.msra.mxu0 0.0
      %391 = vmatprep.subr.mxu0 0.0
      %392 = vmatpush1.msra.mxu0 0.0
      %393 = vmatprep.subr.mxu0 0.0
      %394 = vmatpush1.msra.mxu0 0.0
      %395 = vmatprep.subr.mxu0 0.0
      %396 = vmatpush1.msra.mxu0 0.0
      %397 = vmatprep.subr.mxu0 0.0
      %398 = vmatpush1.msra.mxu0 0.0
      %399 = vmatprep.subr.mxu0 0.0
      %400 = vmatpush1.msra.mxu0 0.0
      %401 = vmatprep.subr.mxu0 0.0
      %402 = vmatpush1.msra.mxu0 0.0
      %403 = vmatprep.subr.mxu0 0.0
      %404 = vmatpush1.msra.mxu0 0.0
      %405 = vmatprep.subr.mxu0 0.0
      %406 = vmatpush1.msra.mxu0 0.0
      %407 = vmatprep.subr.mxu0 0.0
      %408 = vmatpush1.msra.mxu0 0.0
      %409 = vmatprep.subr.mxu0 0.0
      %410 = vmatpush1.msra.mxu0 0.0
      %411 = vmatprep.mubr.f32.mxu0 0.0
      %412 = vmatmul.mubr.f32.gmra.mrb[0].mxu0 %v302
      %v413 = vpop.f32.mrb[0].mxu0
      %v414 = vadd.f32 %v340, %v413
      %v415 = vpop.f32.mrb[0].mxu0
      %v416 = vadd.f32 %v344, %v415
      %417 = vdwg.mxu0
      %v418 = vmax.f32 %v414, 0.0
      %v419 = vmax.f32 %v416, 0.0
      %v420 = vld [vmem:[%s3] sm:$0xff]
      %v421 = vld [vmem:[%s3 + $0x8] sm:$0xff]
      %v422 = vld [vmem:[%s3 + $0x10] sm:$0xff]
      %v423 = vld [vmem:[%s3 + $0x18] sm:$0xff]
      %v424 = vld [vmem:[%s3 + $0x20] sm:$0xff]
      %v425 = vld [vmem:[%s3 + $0x28] sm:$0xff]
      %v426 = vld [vmem:[%s3 + $0x30] sm:$0xff]
      %v427 = vld [vmem:[%s3 + $0x38] sm:$0xff]
      %v428 = vld [vmem:[%s3 + $0x40] sm:$0xff]
      %v429 = vld [vmem:[%s3 + $0x48] sm:$0xff]
      %v430 = vld [vmem:[%s3 + $0x50] sm:$0xff]
      %v431 = vld [vmem:[%s3 + $0x58] sm:$0xff]
      %v432 = vld [vmem:[%s3 + $0x60] sm:$0xff]
      %v433 = vld [vmem:[%s3 + $0x68] sm:$0xff]
      %v434 = vld [vmem:[%s3 + $0x70] sm:$0xff]
      %v435 = vld [vmem:[%s3 + $0x78] sm:$0xff]
      %v436 = vld [vmem:[%s3 + $0x80] sm:$0xff]
      %v437 = vld [vmem:[%s3 + $0x88] sm:$0xff]
      %v438 = vld [vmem:[%s3 + $0x90] sm:$0xff]
      %v439 = vld [vmem:[%s3 + $0x98] sm:$0xff]
      %v440 = vld [vmem:[%s3 + $0xa0] sm:$0xff]
      %v441 = vld [vmem:[%s3 + $0xa8] sm:$0xff]
      %v442 = vld [vmem:[%s3 + $0xb0] sm:$0xff]
      %v443 = vld [vmem:[%s3 + $0xb8] sm:$0xff]
      %v444 = vld [vmem:[%s3 + $0xc0] sm:$0xff]
      %v445 = vld [vmem:[%s3 + $0xc8] sm:$0xff]
      %v446 = vld [vmem:[%s3 + $0xd0] sm:$0xff]
      %v447 = vld [vmem:[%s3 + $0xd8] sm:$0xff]
      %v448 = vld [vmem:[%s3 + $0xe0] sm:$0xff]
      %v449 = vld [vmem:[%s3 + $0xe8] sm:$0xff]
      %v450 = vld [vmem:[%s3 + $0xf0] sm:$0xff]
      %v451 = vld [vmem:[%s3 + $0xf8] sm:$0xff]
      %v452 = vld [vmem:[%s4] sm:$0x1]
      %v454 = vlaneseq
      %v455 = vshrl.u32 %v454, 7
      %v456 = vsub.s32 0, %v455
      %v457 = vrot.slane %v452, %v456
      %459 = vmatprep.subr.mxu0 0.0
      %460 = vmatpush1.msra.mxu0 %v420
      %461 = vmatprep.subr.mxu0 0.0
      %462 = vmatpush1.msra.mxu0 %v421
      %463 = vmatprep.subr.mxu0 0.0
      %464 = vmatpush1.msra.mxu0 %v422
      %465 = vmatprep.subr.mxu0 0.0
      %466 = vmatpush1.msra.mxu0 %v423
      %467 = vmatprep.subr.mxu0 0.0
      %468 = vmatpush1.msra.mxu0 %v424
      %469 = vmatprep.subr.mxu0 0.0
      %470 = vmatpush1.msra.mxu0 %v425
      %471 = vmatprep.subr.mxu0 0.0
      %472 = vmatpush1.msra.mxu0 %v426
      %473 = vmatprep.subr.mxu0 0.0
      %474 = vmatpush1.msra.mxu0 %v427
      %475 = vmatprep.subr.mxu0 0.0
      %476 = vmatpush1.msra.mxu0 %v428
      %477 = vmatprep.subr.mxu0 0.0
      %478 = vmatpush1.msra.mxu0 %v429
      %479 = vmatprep.subr.mxu0 0.0
      %480 = vmatpush1.msra.mxu0 %v430
      %481 = vmatprep.subr.mxu0 0.0
      %482 = vmatpush1.msra.mxu0 %v431
      %483 = vmatprep.subr.mxu0 0.0
      %484 = vmatpush1.msra.mxu0 %v432
      %485 = vmatprep.subr.mxu0 0.0
      %486 = vmatpush1.msra.mxu0 %v433
      %487 = vmatprep.subr.mxu0 0.0
      %488 = vmatpush1.msra.mxu0 %v434
      %489 = vmatprep.subr.mxu0 0.0
      %490 = vmatpush1.msra.mxu0 %v435
      %491 = vmatprep.subr.mxu0 0.0
      %492 = vmatpush1.msra.mxu0 %v436
      %493 = vmatprep.subr.mxu0 0.0
      %494 = vmatpush1.msra.mxu0 %v437
      %495 = vmatprep.subr.mxu0 0.0
      %496 = vmatpush1.msra.mxu0 %v438
      %497 = vmatprep.subr.mxu0 0.0
      %498 = vmatpush1.msra.mxu0 %v439
      %499 = vmatprep.subr.mxu0 0.0
      %500 = vmatpush1.msra.mxu0 %v440
      %501 = vmatprep.subr.mxu0 0.0
      %502 = vmatpush1.msra.mxu0 %v441
      %503 = vmatprep.subr.mxu0 0.0
      %504 = vmatpush1.msra.mxu0 %v442
      %505 = vmatprep.subr.mxu0 0.0
      %506 = vmatpush1.msra.mxu0 %v443
      %507 = vmatprep.subr.mxu0 0.0
      %508 = vmatpush1.msra.mxu0 %v444
      %509 = vmatprep.subr.mxu0 0.0
      %510 = vmatpush1.msra.mxu0 %v445
      %511 = vmatprep.subr.mxu0 0.0
      %512 = vmatpush1.msra.mxu0 %v446
      %513 = vmatprep.subr.mxu0 0.0
      %514 = vmatpush1.msra.mxu0 %v447
      %515 = vmatprep.subr.mxu0 0.0
      %516 = vmatpush1.msra.mxu0 %v448
      %517 = vmatprep.subr.mxu0 0.0
      %518 = vmatpush1.msra.mxu0 %v449
      %519 = vmatprep.subr.mxu0 0.0
      %520 = vmatpush1.msra.mxu0 %v450
      %521 = vmatprep.subr.mxu0 0.0
      %522 = vmatpush1.msra.mxu0 %v451
      %523 = vmatprep.mubr.f32.mxu0 %v419
      %524 = vmatmul.mubr.f32.gmra.mrb[0].mxu0 %v418
      %v525 = vpop.f32.mrb[0].mxu0
      %v526 = vadd.f32 %v457, %v525
      %v527 = vpop.f32.mrb[0].mxu0
      %528 = vdwg.mxu0
      %v529 = vmax.f32 %v526, 0.0
      %v530 = vld [vmem:[%s5] sm:$0xff]
      %v531 = vld [vmem:[%s5 + $0x8] sm:$0xff]
      %v532 = vld [vmem:[%s5 + $0x10] sm:$0xff]
      %v533 = vld [vmem:[%s5 + $0x18] sm:$0xff]
      %v534 = vld [vmem:[%s5 + $0x20] sm:$0xff]
      %v535 = vld [vmem:[%s5 + $0x28] sm:$0xff]
      %v536 = vld [vmem:[%s5 + $0x30] sm:$0xff]
      %v537 = vld [vmem:[%s5 + $0x38] sm:$0xff]
      %v538 = vld [vmem:[%s5 + $0x40] sm:$0xff]
      %v539 = vld [vmem:[%s5 + $0x48] sm:$0xff]
      %v540 = vld [vmem:[%s5 + $0x50] sm:$0xff]
      %v541 = vld [vmem:[%s5 + $0x58] sm:$0xff]
      %v542 = vld [vmem:[%s5 + $0x60] sm:$0xff]
      %v543 = vld [vmem:[%s5 + $0x68] sm:$0xff]
      %v544 = vld [vmem:[%s5 + $0x70] sm:$0xff]
      %v545 = vld [vmem:[%s5 + $0x78] sm:$0xff]
      %v546 = vld [vmem:[%s6] sm:$0xff]
      %v547 = vld [vmem:[%s6 + $0x8] sm:$0xff]
      %v548 = vld [vmem:[%s6 + $0x10] sm:$0xff]
      %v549 = vld [vmem:[%s6 + $0x18] sm:$0xff]
      %v550 = vld [vmem:[%s6 + $0x20] sm:$0xff]
      %v551 = vld [vmem:[%s6 + $0x28] sm:$0xff]
      %v552 = vld [vmem:[%s6 + $0x30] sm:$0xff]
      %v553 = vld [vmem:[%s6 + $0x38] sm:$0xff]
      %v554 = vld [vmem:[%s6 + $0x40] sm:$0xff]
      %v555 = vld [vmem:[%s6 + $0x48] sm:$0xff]
      %v556 = vld [vmem:[%s6 + $0x50] sm:$0xff]
      %v557 = vld [vmem:[%s6 + $0x58] sm:$0xff]
      %v558 = vld [vmem:[%s6 + $0x60] sm:$0xff]
      %v559 = vld [vmem:[%s6 + $0x68] sm:$0xff]
      %v560 = vld [vmem:[%s6 + $0x70] sm:$0xff]
      %v561 = vld [vmem:[%s6 + $0x78] sm:$0xff]
      %562 = vmatprep.subr.mxu0 0.0
      %563 = vmatpush1.msra.mxu0 %v546
      %564 = vmatprep.subr.mxu0 0.0
      %565 = vmatpush1.msra.mxu0 %v547
      %566 = vmatprep.subr.mxu0 0.0
      %567 = vmatpush1.msra.mxu0 %v548
      %568 = vmatprep.subr.mxu0 0.0
      %569 = vmatpush1.msra.mxu0 %v549
      %570 = vmatprep.subr.mxu0 0.0
      %571 = vmatpush1.msra.mxu0 %v550
      %572 = vmatprep.subr.mxu0 0.0
      %573 = vmatpush1.msra.mxu0 %v551
      %574 = vmatprep.subr.mxu0 0.0
      %575 = vmatpush1.msra.mxu0 %v552
      %576 = vmatprep.subr.mxu0 0.0
      %577 = vmatpush1.msra.mxu0 %v553
      %578 = vmatprep.subr.mxu0 0.0
      %579 = vmatpush1.msra.mxu0 %v554
      %580 = vmatprep.subr.mxu0 0.0
      %581 = vmatpush1.msra.mxu0 %v555
      %582 = vmatprep.subr.mxu0 0.0
      %583 = vmatpush1.msra.mxu0 %v556
      %584 = vmatprep.subr.mxu0 0.0
      %585 = vmatpush1.msra.mxu0 %v557
      %586 = vmatprep.subr.mxu0 0.0
      %587 = vmatpush1.msra.mxu0 %v558
      %588 = vmatprep.subr.mxu0 0.0
      %589 = vmatpush1.msra.mxu0 %v559
      %590 = vmatprep.subr.mxu0 0.0
      %591 = vmatpush1.msra.mxu0 %v560
      %592 = vmatprep.subr.mxu0 0.0
      %593 = vmatpush1.msra.mxu0 %v561
      %594 = vmatprep.subr.mxu0 0.0
      %595 = vmatpush1.msra.mxu0 0.0
      %596 = vmatprep.subr.mxu0 0.0
      %597 = vmatpush1.msra.mxu0 0.0
      %598 = vmatprep.subr.mxu0 0.0
      %599 = vmatpush1.msra.mxu0 0.0
      %600 = vmatprep.subr.mxu0 0.0
      %601 = vmatpush1.msra.mxu0 0.0
      %602 = vmatprep.subr.mxu0 0.0
      %603 = vmatpush1.msra.mxu0 0.0
      %604 = vmatprep.subr.mxu0 0.0
      %605 = vmatpush1.msra.mxu0 0.0
      %606 = vmatprep.subr.mxu0 0.0
      %607 = vmatpush1.msra.mxu0 0.0
      %608 = vmatprep.subr.mxu0 0.0
      %609 = vmatpush1.msra.mxu0 0.0
      %610 = vmatprep.subr.mxu0 0.0
      %611 = vmatpush1.msra.mxu0 0.0
      %612 = vmatprep.subr.mxu0 0.0
      %613 = vmatpush1.msra.mxu0 0.0
      %614 = vmatprep.subr.mxu0 0.0
      %615 = vmatpush1.msra.mxu0 0.0
      %616 = vmatprep.subr.mxu0 0.0
      %617 = vmatpush1.msra.mxu0 0.0
      %618 = vmatprep.subr.mxu0 0.0
      %619 = vmatpush1.msra.mxu0 0.0
      %620 = vmatprep.subr.mxu0 0.0
      %621 = vmatpush1.msra.mxu0 0.0
      %622 = vmatprep.subr.mxu0 0.0
      %623 = vmatpush1.msra.mxu0 0.0
      %624 = vmatprep.subr.mxu0 0.0
      %625 = vmatpush1.msra.mxu0 0.0
      %626 = vmatprep.mubr.f32.mxu0 0.0
      %627 = vmatmul.mubr.f32.gmra.mrb[0].mxu0 %v529
      %v628 = vpop.f32.mrb[0].mxu0
      %v629 = vadd.f32 0.0, %v628
      %v630 = vpop.f32.mrb[0].mxu0
      %631 = vdwg.mxu0
      %632 = vmatprep.subr.mxu0 0.0
      %633 = vmatpush1.msra.mxu0 %v530
      %634 = vmatprep.subr.mxu0 0.0
      %635 = vmatpush1.msra.mxu0 %v531
      %636 = vmatprep.subr.mxu0 0.0
      %637 = vmatpush1.msra.mxu0 %v532
      %638 = vmatprep.subr.mxu0 0.0
      %639 = vmatpush1.msra.mxu0 %v533
      %640 = vmatprep.subr.mxu0 0.0
      %641 = vmatpush1.msra.mxu0 %v534
      %642 = vmatprep.subr.mxu0 0.0
      %643 = vmatpush1.msra.mxu0 %v535
      %644 = vmatprep.subr.mxu0 0.0
      %645 = vmatpush1.msra.mxu0 %v536
      %646 = vmatprep.subr.mxu0 0.0
      %647 = vmatpush1.msra.mxu0 %v537
      %648 = vmatprep.subr.mxu0 0.0
      %649 = vmatpush1.msra.mxu0 %v538
      %650 = vmatprep.subr.mxu0 0.0
      %651 = vmatpush1.msra.mxu0 %v539
      %652 = vmatprep.subr.mxu0 0.0
      %653 = vmatpush1.msra.mxu0 %v540
      %654 = vmatprep.subr.mxu0 0.0
      %655 = vmatpush1.msra.mxu0 %v541
      %656 = vmatprep.subr.mxu0 0.0
      %657 = vmatpush1.msra.mxu0 %v542
      %658 = vmatprep.subr.mxu0 0.0
      %659 = vmatpush1.msra.mxu0 %v543
      %660 = vmatprep.subr.mxu0 0.0
      %661 = vmatpush1.msra.mxu0 %v544
      %662 = vmatprep.subr.mxu0 0.0
      %663 = vmatpush1.msra.mxu0 %v545
      %664 = vmatprep.subr.mxu0 0.0
      %665 = vmatpush1.msra.mxu0 0.0
      %666 = vmatprep.subr.mxu0 0.0
      %667 = vmatpush1.msra.mxu0 0.0
      %668 = vmatprep.subr.mxu0 0.0
      %669 = vmatpush1.msra.mxu0 0.0
      %670 = vmatprep.subr.mxu0 0.0
      %671 = vmatpush1.msra.mxu0 0.0
      %672 = vmatprep.subr.mxu0 0.0
      %673 = vmatpush1.msra.mxu0 0.0
      %674 = vmatprep.subr.mxu0 0.0
      %675 = vmatpush1.msra.mxu0 0.0
      %676 = vmatprep.subr.mxu0 0.0
      %677 = vmatpush1.msra.mxu0 0.0
      %678 = vmatprep.subr.mxu0 0.0
      %679 = vmatpush1.msra.mxu0 0.0
      %680 = vmatprep.subr.mxu0 0.0
      %681 = vmatpush1.msra.mxu0 0.0
      %682 = vmatprep.subr.mxu0 0.0
      %683 = vmatpush1.msra.mxu0 0.0
      %684 = vmatprep.subr.mxu0 0.0
      %685 = vmatpush1.msra.mxu0 0.0
      %686 = vmatprep.subr.mxu0 0.0
      %687 = vmatpush1.msra.mxu0 0.0
      %688 = vmatprep.subr.mxu0 0.0
      %689 = vmatpush1.msra.mxu0 0.0
      %690 = vmatprep.subr.mxu0 0.0
      %691 = vmatpush1.msra.mxu0 0.0
      %692 = vmatprep.subr.mxu0 0.0
      %693 = vmatpush1.msra.mxu0 0.0
      %694 = vmatprep.subr.mxu0 0.0
      %695 = vmatpush1.msra.mxu0 0.0
      %696 = vmatprep.mubr.f32.mxu0 0.0
      %697 = vmatmul.mubr.f32.gmra.mrb[0].mxu0 %v302
      %v698 = vpop.f32.mrb[0].mxu0
      %v699 = vadd.f32 %v629, %v698
      %v700 = vpop.f32.mrb[0].mxu0
      %701 = vdwg.mxu0
      %s702 = sld [smem:[#allocation2]]
      %v703 = vstv %s702
      %v704 = vadd.f32 %v699, %v703
      %v705 = vxor.u32 %v704, 2147483648
      %v706 = vmul.f32 %v705, 1.442695
      %v707 = vpow.pop %v706
      %v708 = vadd.f32 %v707, 1.0
      %v709 = vrcp.pop %v708
      %v710 = vmul.f32 1.0, %v709
      %vm711 = vcmask 64512
      %712 = vst.msk [vmem:[%s301] sm:$0xff] %vm711, %v710
      %p713 = scmp.lt.s32.totalorder %s20, 3
      %s714 = scalar_select %p713, %s20, 3
      %s715 = smul.addr %s714, 8
      %s716 = scalar_lea.vmem %s8, %s715
      // Predicated region
      $region53: #{wide_deep_forward.1} parent=51 // pred_check
        %p717 = pneg %p211
      $region54: #{wide_deep_forward.1} parent=51 // pred_check_branch
        %719 = sbr.rel (%p717) target = $region56
      $region55: #{wide_deep_forward.1} parent=51 // pred_region
        _
      $region56: #{wide_deep_forward.1} parent=51 // pred_fallthru
        _
    $region52: #{wide_deep_forward.1} parent=5 // pred_fallthru
      _
    %p720 = scmp.le.s32.totalorder 2, %s15
    // Predicated region
    $region57: #{wide_deep_forward.1} parent=5 // pred_check
      %p721 = pneg %p720
    $region58: #{wide_deep_forward.1} parent=5 // pred_check_branch
      %723 = sbr.rel (%p721) target = $region60
    $region59: #{wide_deep_forward.1} parent=5 // pred_region
      %s724 = ssub.s32 %s15, 2
      // Predicated region
      $region61: #{wide_deep_forward.1} parent=59 // pred_check
        %p725 = pneg %p217
      $region62: #{wide_deep_forward.1} parent=59 // pred_check_branch
        %727 = sbr.rel (%p725) target = $region64
      $region63: #{wide_deep_forward.1} parent=59 // pred_region
        %p728 = scmp.lt.s32.totalorder %s21, 3
        %s729 = scalar_select %p728, %s21, 3
        %s730 = smul.addr %s729, 8
        %s731 = scalar_lea.vmem %s8, %s730
      $region64: #{wide_deep_forward.1} parent=59 // pred_fallthru
        _
    $region60: #{wide_deep_forward.1} parent=5 // pred_fallthru
      _
  $region6: #{wide_deep_forward.1} parent=0 // loop_footer
    %s19 = sadd.s32 1, %s15
  $region7: #{wide_deep_forward.1} parent=0 // loop_footer_branch
    %14 = sbr.rel target = $region3
  $region8: #{wide_deep_forward.1} parent=0 // loop_exit
    _

</llo_original>
